<compile_context>
chip_gen: v7x
topology: tpu7x:2x2x1
jax: 0.10.0
libtpu: 0.0.40
codegen_flags: <defaults>
</compile_context>

<pallas_src>
import math
from functools import partial

import jax
import jax.numpy as jnp
from jax import lax
from jax.experimental import pallas as pl
from jax.experimental.pallas import tpu as pltpu

_EPS = 1e-5  # torch.nn.functional.layer_norm default

_VMEM_LIMIT_BYTES = 48 * 1024 * 1024    # < 64 MiB physical VMEM on v7x
_BLOCK_BUDGET_BYTES = 12 * 1024 * 1024  # I/O double-buffers + f32 temporaries
_MAX_TILE_ROWS = 2048                   # mem-bound roofline plateaus ~512-1024


def _ln_kernel(x_ref, g_ref, *refs, eps):
    """Plain LayerNorm tile: normalize each row of the (tm, D) block.

    refs is (beta_ref, out_ref) when beta is present, else (out_ref,).
    """
    o_ref = refs[-1]
    b_ref = refs[0] if len(refs) == 2 else None
    x = x_ref[...].astype(jnp.float32)
    mean = jnp.mean(x, axis=-1, keepdims=True)
    c = x - mean
    var = jnp.mean(c * c, axis=-1, keepdims=True)
    # Affine (and downcast) in gamma's dtype: bf16 for bf16 activations
    # (packed-bf16 VPU on v6e/v7x), f32 otherwise.
    y = (c * lax.rsqrt(var + eps)).astype(g_ref.dtype)
    out = y * g_ref[...]
    if b_ref is not None:
        out = out + b_ref[...]
    o_ref[...] = out.astype(o_ref.dtype)


def _ln_folded_kernel(x_ref, g_ref, m_ref, *refs, eps):
    """Lane-folded LayerNorm tile.

    Each (tm, k*D) row packs k independent length-D rows along the lane axis
    (k*D == 128, so HBM loads/stores are lane-dense). m_ref is the (k*D, k*D)
    block-diagonal averaging matrix (1/D inside each DxD block), so `x @ M`
    is each segment's mean broadcast back over its own segment. The dot runs
    at HIGHEST precision on the MXU (f32-accurate, no VPU hi/lo splitting).
    """
    o_ref = refs[-1]
    b_ref = refs[0] if len(refs) == 2 else None
    x = x_ref[...].astype(jnp.float32)
    m = m_ref[...]

    def seg_mean(v):
        return jnp.dot(v, m, precision=lax.Precision.HIGHEST,
                       preferred_element_type=jnp.float32)

    mean = seg_mean(x)
    c = x - mean
    var = seg_mean(c * c)
    y = (c * lax.rsqrt(var + eps)).astype(g_ref.dtype)
    out = y * g_ref[...]
    if b_ref is not None:
        out = out + b_ref[...]
    o_ref[...] = out.astype(o_ref.dtype)


def _segment_avg_matrix(k, d):
    """(k*d, k*d) block-diagonal f32 matrix with 1/d inside each d x d block."""
    seg = jnp.arange(k * d) // d
    return (seg[:, None] == seg[None, :]).astype(jnp.float32) / d


def _layer_norm_xla(x2d, gamma, beta, eps):
    """Tiny plain-XLA epilogue for the <= k-1 remainder rows of a ragged fold."""
    xf = x2d.astype(jnp.float32)
    mean = jnp.mean(xf, axis=-1, keepdims=True)
    c = xf - mean
    var = jnp.mean(c * c, axis=-1, keepdims=True)
    y = c * lax.rsqrt(var + eps)
    y = y * gamma.astype(jnp.float32)
    if beta is not None:
        y = y + beta.astype(jnp.float32)
    return y.astype(x2d.dtype)


def _layer_norm_2d(x2d, gamma, beta, *, k, eps, block_rows):
    rows, D = x2d.shape
    lane = k * D
    rows2 = rows // k

    # Affine dtype: bf16 affine on bf16 activations (v6e/v7x packed-VPU win;
    # on v5e this still lowers correctly, just without the packing benefit).
    affine_dtype = jnp.bfloat16 if x2d.dtype == jnp.bfloat16 else jnp.float32
    g = gamma.reshape(1, D).astype(affine_dtype)
    b = None if beta is None else beta.reshape(1, D).astype(affine_dtype)

    if k > 1:
        x2d = x2d.reshape(rows2, lane)
        g = jnp.tile(g, (1, k))
        if b is not None:
            b = jnp.tile(b, (1, k))

    itemsize = x2d.dtype.itemsize
    sublane = {4: 8, 2: 16, 1: 32}.get(itemsize, 8)

    # Row-tile size: fill the (modest) block budget, counting both the
    # double-buffered I/O blocks and the in-kernel f32 temporaries (x, c, c*c).
    if block_rows is None:
        bytes_per_row = 4 * lane * itemsize + 3 * lane * 4
        tm = max(1, _BLOCK_BUDGET_BYTES // bytes_per_row)
        tm = min(tm, _MAX_TILE_ROWS)
        # Prefer >= 8 grid steps (pipelining + v7x megacore) while tiles stay
        # above ~256 rows (per-step overhead ~0.35 us).
        while tm > 256 and pl.cdiv(rows2, tm) < 8:
            tm //= 2
    else:
        tm = block_rows
    tm = max(sublane, (tm // sublane) * sublane)

    if rows2 >= 2 * sublane:
        # Guarantee at least 2 grid steps so both v7x TensorCores get work and
        # DMA/compute overlap exists.
        tm = min(tm, max(sublane, ((rows2 // 2) // sublane) * sublane))
    else:
        tm = rows2  # single block covering the full (possibly unaligned) row dim
    grid = (pl.cdiv(rows2, tm),)

    row_spec = pl.BlockSpec((tm, lane), lambda i: (i, 0))
    vec_spec = pl.BlockSpec((1, lane), lambda i: (0, 0))

    if k > 1:
        kernel = partial(_ln_folded_kernel, eps=eps)
        in_specs = [row_spec, vec_spec, pl.BlockSpec((lane, lane), lambda i: (0, 0))]
        args = [x2d, g, _segment_avg_matrix(k, D)]
        flops = rows2 * (4 * lane * lane + 8 * lane)
    else:
        kernel = partial(_ln_kernel, eps=eps)
        in_specs = [row_spec, vec_spec]
        args = [x2d, g]
        flops = rows2 * 8 * lane
    if b is not None:
        in_specs.append(vec_spec)
        args.append(b)

    out = pl.pallas_call(
        kernel,
        out_shape=jax.ShapeDtypeStruct((rows2, lane), x2d.dtype),
        grid_spec=pltpu.PrefetchScalarGridSpec(
            num_scalar_prefetch=0,
            grid=grid,
            in_specs=in_specs,
            out_specs=row_spec,
        ),
        compiler_params=pltpu.CompilerParams(
            dimension_semantics=("parallel",),
            vmem_limit_bytes=_VMEM_LIMIT_BYTES,
        ),
        cost_estimate=pl.CostEstimate(
            flops=flops,
            transcendentals=rows2 * k,
            bytes_accessed=2 * rows2 * lane * itemsize + 4 * lane * 4,
        ),
    )(*args)

    return out.reshape(rows, D)


def layer_norm(x, gamma, beta=None, *, eps=_EPS, block_rows=None):
    """LayerNorm over the last axis of x (any rank >= 1).

    gamma has shape (D,). beta=None means the module's zero buffer (the add is
    elided entirely — one fewer input DMA and one fewer VPU add per element).
    """
    # TODO(synk): for very large D (hundreds of thousands, f32) add a feature-dim
    # grid axis ("arbitrary") with running sum / sum-of-squares accumulators so
    # VMEM stays bounded on v7x (64 MiB) instead of one (tm, D) block per step.
    orig_shape = x.shape
    D = orig_shape[-1]
    rows = math.prod(orig_shape[:-1])
    x2d = x.reshape(rows, D)

    # Lane-dense folding for narrow feature dims (D=32 -> 4 rows per 128 lanes).
    k = 1
    if D < 128 and 128 % D == 0 and (128 // D) > 1 and rows >= (128 // D):
        k = 128 // D
    main_rows = (rows // k) * k
    rem = rows - main_rows

    out_main = _layer_norm_2d(x2d[:main_rows], gamma, beta,
                              k=k, eps=eps, block_rows=block_rows)
    if rem:
        # Ragged fold: keep the lane-dense path for all but the <= k-1 tail rows.
        out_rem = _layer_norm_xla(x2d[main_rows:], gamma, beta, eps)
        out2d = jnp.concatenate([out_main, out_rem], axis=0)
    else:
        out2d = out_main
    return out2d.reshape(orig_shape)


def layer_norm_ref(x, gamma, beta=None):
    xf = x.astype(jnp.float32)
    mean = jnp.mean(xf, axis=-1, keepdims=True)
    var = jnp.mean((xf - mean) ** 2, axis=-1, keepdims=True)
    y = (xf - mean) * lax.rsqrt(var + _EPS)
    y = y * gamma.astype(jnp.float32)
    if beta is not None:
        y = y + beta.astype(jnp.float32)
    return y.astype(x.dtype)


def _check(x, gamma, beta, atol, rtol, **kw):
    out = jax.block_until_ready(layer_norm(x, gamma, beta, **kw))
    ref = layer_norm_ref(x, gamma, beta)
    assert out.shape == x.shape and out.dtype == x.dtype
    err = jnp.max(jnp.abs(out.astype(jnp.float32) - ref.astype(jnp.float32)))
    assert jnp.allclose(out.astype(jnp.float32), ref.astype(jnp.float32),
                        atol=atol, rtol=rtol), float(err)


if __name__ == "__main__":
    key = jax.random.PRNGKey(0)
    k1, k2, k3, k4, k5 = jax.random.split(key, 5)

    # Module-consistent small shape (batch=2, seq=16, hidden=32): lane-folded
    # path (D=32 -> 4 rows per 128-lane row), zero beta buffer elided.
    D1 = 32
    x1 = jax.random.normal(k1, (2, 16, D1), dtype=jnp.float32)
    gamma1 = jnp.ones((D1,), jnp.float32)   # nn.Parameter(torch.ones(dim))
    _check(x1, gamma1, None, atol=3e-5, rtol=3e-5)

    # Wider hidden dim (no fold), explicit nonzero beta, multi-step grid with a
    # partial tail block: 40 rows, 16-row tiles -> blocks of 16 / 16 / 8.
    D2 = 256
    x2 = jax.random.normal(k2, (5, 8, D2), dtype=jnp.float32)
    gamma2 = jax.random.normal(k3, (D2,), dtype=jnp.float32)
    beta2 = jax.random.normal(k4, (D2,), dtype=jnp.float32)
    _check(x2, gamma2, beta2, atol=1e-4, rtol=1e-4, block_rows=16)
    _check(x2, gamma2, beta2, atol=1e-4, rtol=1e-4)   # auto tile sizing path

    # bf16 activations through the folded path (bf16 affine).
    x3 = jax.random.normal(k5, (2, 16, D1), dtype=jnp.float32).astype(jnp.bfloat16)
    _check(x3, gamma1, None, atol=2e-2, rtol=2e-2)

    # Ragged fold: rows=15 not divisible by k=4 -> 12 folded rows + 3-row
    # plain-XLA epilogue, with a nonzero beta.
    x4 = jax.random.normal(k2, (3, 5, D1), dtype=jnp.float32)
    beta4 = jax.random.normal(k3, (D1,), dtype=jnp.float32)
    _check(x4, gamma1, beta4, atol=3e-5, rtol=3e-5)

    print("KERNEL_OK")
</pallas_src>

<mosaic_0001>
module attributes {stable_mosaic.version = 11 : i64} {
  func.func @_ln_folded_kernel(%arg0: i32, %arg1: memref<8x128xf32, #tpu.memory_space<vmem>>, %arg2: memref<1x128xf32, #tpu.memory_space<vmem>>, %arg3: memref<128x128xf32, #tpu.memory_space<vmem>>, %arg4: memref<8x128xf32, #tpu.memory_space<vmem>>) attributes {dimension_semantics = [#tpu.dimension_semantics<parallel>], iteration_bounds = array<i64: 1>, scalar_prefetch = 0 : i64, scratch_operands = 0 : i64, tpu.core_type = #tpu.core_type<tc>, window_params = [{transform_indices = @transform_0, window_bounds = array<i64: 8, 128>}, {pipeline_mode = #tpu.pipeline_mode<synchronous>, transform_indices = @transform_1, window_bounds = array<i64: 1, 128>}, {pipeline_mode = #tpu.pipeline_mode<synchronous>, transform_indices = @transform_2, window_bounds = array<i64: 128, 128>}, {transform_indices = @transform_3, window_bounds = array<i64: 8, 128>}]} {
    %c0 = arith.constant 0 : index
    %c0_0 = arith.constant 0 : index
    %0 = vector.load %arg1[%c0, %c0_0] : memref<8x128xf32, #tpu.memory_space<vmem>>, vector<8x128xf32>
    %c0_1 = arith.constant 0 : index
    %c0_2 = arith.constant 0 : index
    %1 = vector.load %arg3[%c0_1, %c0_2] : memref<128x128xf32, #tpu.memory_space<vmem>>, vector<128x128xf32>
    %cst = arith.constant dense<0.000000e+00> : vector<8x128xf32>
    %2 = tpu.matmul %0, %1, %cst {dimension_numbers = #tpu.dot_dimension_numbers<[1], [0], [0], [1], [0, 0, 1, 1], [], []>, precision = #tpu.contract_precision<fp32>} : vector<8x128xf32>, vector<128x128xf32>, vector<8x128xf32> -> vector<8x128xf32>
    %3 = arith.subf %0, %2 : vector<8x128xf32>
    %4 = arith.mulf %3, %3 : vector<8x128xf32>
    %cst_3 = arith.constant dense<0.000000e+00> : vector<8x128xf32>
    %5 = tpu.matmul %4, %1, %cst_3 {dimension_numbers = #tpu.dot_dimension_numbers<[1], [0], [0], [1], [0, 0, 1, 1], [], []>, precision = #tpu.contract_precision<fp32>} : vector<8x128xf32>, vector<128x128xf32>, vector<8x128xf32> -> vector<8x128xf32>
    %cst_4 = arith.constant 9.99999974E-6 : f32
    %6 = vector.broadcast %cst_4 : f32 to vector<8x128xf32>
    %7 = arith.addf %5, %6 : vector<8x128xf32>
    %8 = math.rsqrt %7 : vector<8x128xf32>
    %9 = arith.mulf %3, %8 : vector<8x128xf32>
    %c0_5 = arith.constant 0 : index
    %c0_6 = arith.constant 0 : index
    %10 = vector.load %arg2[%c0_5, %c0_6] : memref<1x128xf32, #tpu.memory_space<vmem>>, vector<1x128xf32>
    %11 = vector.broadcast %10 : vector<1x128xf32> to vector<8x128xf32>
    %12 = arith.mulf %9, %11 : vector<8x128xf32>
    %c0_7 = arith.constant 0 : index
    %c0_8 = arith.constant 0 : index
    %13 = vector.load %arg4[%c0_7, %c0_8] : memref<8x128xf32, #tpu.memory_space<vmem>>, vector<8x128xf32>
    tpu.vector_store %arg4[%c0_7, %c0_8], %12 {strides = array<i32>} : memref<8x128xf32, #tpu.memory_space<vmem>>, vector<8x128xf32>,
    return
  }
  func.func @transform_0(%arg0: i32) -> (i32, i32) {
    %c0_i32 = arith.constant 0 : i32
    %c0_i32_0 = arith.constant 0 : i32
    return %arg0, %c0_i32 : i32, i32
  }
  func.func @transform_1(%arg0: i32) -> (i32, i32) {
    %c0_i32 = arith.constant 0 : i32
    %c0_i32_0 = arith.constant 0 : i32
    %c0_i32_1 = arith.constant 0 : i32
    return %c0_i32, %c0_i32_0 : i32, i32
  }
  func.func @transform_2(%arg0: i32) -> (i32, i32) {
    %c0_i32 = arith.constant 0 : i32
    %c0_i32_0 = arith.constant 0 : i32
    %c0_i32_1 = arith.constant 0 : i32
    return %c0_i32, %c0_i32_0 : i32, i32
  }
  func.func @transform_3(%arg0: i32) -> (i32, i32) {
    %c0_i32 = arith.constant 0 : i32
    %c0_i32_0 = arith.constant 0 : i32
    return %arg0, %c0_i32 : i32, i32
  }
}

</mosaic_0001>

<llo_original>
// kernel: tpu_custom_call.1
$region0: #{tpu_custom_call.1}
  #allocation0 [shape = 'u32[]', space=smem, size = 0x4, offset = 0x4, fixed_abs, tag = 'smem constant byte address 0x4 - core index']
  #allocation1 [shape = 'u32[144,128]{1,0:T(1,128)}', space=vmem, size = 0x12000, scoped, tag = 'internal scratch']
  %s0 = inlined_call_operand.hbm [shape: f32[8,128], index: 0, kind: input, shape index: {}]
  %s1 = inlined_call_operand.vmem [shape: f32[1,128], index: 1, kind: input, shape index: {}]
  %s2 = inlined_call_operand.hbm [shape: f32[128,128], index: 2, kind: input, shape index: {}]
  %s3 = inlined_call_operand.hbm [shape: f32[8,128], index: 3, kind: output, shape index: {}]
  %s4 = sld [smem:[#allocation0]]
  $region30: #{tpu_custom_call.1} parent=0
    _
  %s6 = ssub.s32 1, %s4
  %s7 = scalar_select 0, %s6, %s4
  $region1: #{tpu_custom_call.1} parent=0
    #allocation2 [shape = 'u8[4096]{0}', space=vmem, size = 0x1000, scoped, tag = 'input window, operand 0, single buffered']
    #allocation3 [shape = 's32[1]{0}', space=sflag, size = 0x4, scoped, tag = 'scoped memory for tpu_custom_call.1']
    #allocation4 [shape = 's32[1]{0}', space=sflag, size = 0x4, scoped, tag = 'scoped memory for tpu_custom_call.1']
    #allocation5 [shape = 'u8[65536]{0}', space=vmem, size = 0x10000, scoped, tag = 'input window, operand 2, single buffered']
    #allocation6 [shape = 's32[1]{0}', space=sflag, size = 0x4, scoped, tag = 'scoped memory for tpu_custom_call.1']
    #allocation7 [shape = 'u8[4096]{0}', space=vmem, size = 0x1000, scoped, tag = 'output window, operand 0, single buffered']
    %8 = vsyncpa [#allocation3], 0
    %9 = vsyncpa [#allocation6], 0
    %10 = vsyncpa [#allocation4], 0
    // Predicated region
    $region2: #{tpu_custom_call.1} parent=1 // pred_check
      _
    $region3: #{tpu_custom_call.1} parent=1 // pred_check_branch
      %12 = sbr.rel (0) target = $region5
    $region4: #{tpu_custom_call.1} parent=1 // pred_region
      %s14 = ssub.s32 128, 128
      %15 = vsyncadd [#allocation3], %s14
      %s17 = sshll.u32 [#allocation2], 4
      %s18 = int_to_ptr.vmem [resolvable:$true] %s17
      %20 = dma.hbm_to_vmem [thread:$0]  %s0, 128, %s18, [#allocation3]
    $region5: #{tpu_custom_call.1} parent=1 // pred_fallthru
      _
    // Predicated region
    $region6: #{tpu_custom_call.1} parent=1 // pred_check
      _
    $region7: #{tpu_custom_call.1} parent=1 // pred_check_branch
      %22 = sbr.rel (0) target = $region9
    $region8: #{tpu_custom_call.1} parent=1 // pred_region
      _
    $region9: #{tpu_custom_call.1} parent=1 // pred_fallthru
      _
    // Predicated region
    $region10: #{tpu_custom_call.1} parent=1 // pred_check
      _
    $region11: #{tpu_custom_call.1} parent=1 // pred_check_branch
      %24 = sbr.rel (0) target = $region13
    $region12: #{tpu_custom_call.1} parent=1 // pred_region
      %s26 = ssub.s32 2048, 2048
      %27 = vsyncadd [#allocation6], %s26
      %s28 = sshll.u32 [#allocation5], 4
      %s29 = int_to_ptr.vmem [resolvable:$true] %s28
      %34 = dma.hbm_to_vmem [thread:$0]  %s2, 2048, %s29, [#allocation6], 128, 128, 8
    $region13: #{tpu_custom_call.1} parent=1 // pred_fallthru
      _
    // Predicated region
    $region14: #{tpu_custom_call.1} parent=1 // pred_check
      _
    $region15: #{tpu_custom_call.1} parent=1 // pred_check_branch
      %36 = sbr.rel (0) target = $region17
    $region16: #{tpu_custom_call.1} parent=1 // pred_region
      %37 = dma.done [#allocation3], 128
    $region17: #{tpu_custom_call.1} parent=1 // pred_fallthru
      _
    // Predicated region
    $region18: #{tpu_custom_call.1} parent=1 // pred_check
      _
    $region19: #{tpu_custom_call.1} parent=1 // pred_check_branch
      %39 = sbr.rel (0) target = $region21
    $region20: #{tpu_custom_call.1} parent=1 // pred_region
      %40 = dma.done [#allocation6], 2048
    $region21: #{tpu_custom_call.1} parent=1 // pred_fallthru
      _
    %v41 = vld [vmem:[#allocation2] sm:$0xff]
    %v42 = vld [vmem:[#allocation5] sm:$0xff]
    %v43 = vld [vmem:[#allocation5 + $0x8] sm:$0xff]
    %v44 = vld [vmem:[#allocation5 + $0x10] sm:$0xff]
    %v45 = vld [vmem:[#allocation5 + $0x18] sm:$0xff]
    %v46 = vld [vmem:[#allocation5 + $0x20] sm:$0xff]
    %v47 = vld [vmem:[#allocation5 + $0x28] sm:$0xff]
    %v48 = vld [vmem:[#allocation5 + $0x30] sm:$0xff]
    %v49 = vld [vmem:[#allocation5 + $0x38] sm:$0xff]
    %v50 = vld [vmem:[#allocation5 + $0x40] sm:$0xff]
    %v51 = vld [vmem:[#allocation5 + $0x48] sm:$0xff]
    %v52 = vld [vmem:[#allocation5 + $0x50] sm:$0xff]
    %v53 = vld [vmem:[#allocation5 + $0x58] sm:$0xff]
    %v54 = vld [vmem:[#allocation5 + $0x60] sm:$0xff]
    %v55 = vld [vmem:[#allocation5 + $0x68] sm:$0xff]
    %v56 = vld [vmem:[#allocation5 + $0x70] sm:$0xff]
    %v57 = vld [vmem:[#allocation5 + $0x78] sm:$0xff]
    %58 = vmatprep.subr.mxu0 0.0
    %v59 = vand.u32 %v42, 4294901760
    %60 = vmatpush1.msra.mxu0 %v59
    %61 = vmatprep.subr.mxu0 0.0
    %v62 = vand.u32 %v43, 4294901760
    %63 = vmatpush1.msra.mxu0 %v62
    %64 = vmatprep.subr.mxu0 0.0
    %v65 = vand.u32 %v44, 4294901760
    %66 = vmatpush1.msra.mxu0 %v65
    %67 = vmatprep.subr.mxu0 0.0
    %v68 = vand.u32 %v45, 4294901760
    %69 = vmatpush1.msra.mxu0 %v68
    %70 = vmatprep.subr.mxu0 0.0
    %v71 = vand.u32 %v46, 4294901760
    %72 = vmatpush1.msra.mxu0 %v71
    %73 = vmatprep.subr.mxu0 0.0
    %v74 = vand.u32 %v47, 4294901760
    %75 = vmatpush1.msra.mxu0 %v74
    %76 = vmatprep.subr.mxu0 0.0
    %v77 = vand.u32 %v48, 4294901760
    %78 = vmatpush1.msra.mxu0 %v77
    %79 = vmatprep.subr.mxu0 0.0
    %v80 = vand.u32 %v49, 4294901760
    %81 = vmatpush1.msra.mxu0 %v80
    %82 = vmatprep.subr.mxu0 0.0
    %v83 = vand.u32 %v50, 4294901760
    %84 = vmatpush1.msra.mxu0 %v83
    %85 = vmatprep.subr.mxu0 0.0
    %v86 = vand.u32 %v51, 4294901760
    %87 = vmatpush1.msra.mxu0 %v86
    %88 = vmatprep.subr.mxu0 0.0
    %v89 = vand.u32 %v52, 4294901760
    %90 = vmatpush1.msra.mxu0 %v89
    %91 = vmatprep.subr.mxu0 0.0
    %v92 = vand.u32 %v53, 4294901760
    %93 = vmatpush1.msra.mxu0 %v92
    %94 = vmatprep.subr.mxu0 0.0
    %v95 = vand.u32 %v54, 4294901760
    %96 = vmatpush1.msra.mxu0 %v95
    %97 = vmatprep.subr.mxu0 0.0
    %v98 = vand.u32 %v55, 4294901760
    %99 = vmatpush1.msra.mxu0 %v98
    %100 = vmatprep.subr.mxu0 0.0
    %v101 = vand.u32 %v56, 4294901760
    %102 = vmatpush1.msra.mxu0 %v101
    %103 = vmatprep.subr.mxu0 0.0
    %v104 = vand.u32 %v57, 4294901760
    %105 = vmatpush1.msra.mxu0 %v104
    %106 = vmatprep.subr.mxu0 0.0
    %107 = vmatpush1.msra.mxu0 0.0
    %108 = vmatprep.subr.mxu0 0.0
    %109 = vmatpush1.msra.mxu0 0.0
    %110 = vmatprep.subr.mxu0 0.0
    %111 = vmatpush1.msra.mxu0 0.0
    %112 = vmatprep.subr.mxu0 0.0
    %113 = vmatpush1.msra.mxu0 0.0
    %114 = vmatprep.subr.mxu0 0.0
    %115 = vmatpush1.msra.mxu0 0.0
    %116 = vmatprep.subr.mxu0 0.0
    %117 = vmatpush1.msra.mxu0 0.0
    %118 = vmatprep.subr.mxu0 0.0
    %119 = vmatpush1.msra.mxu0 0.0
    %120 = vmatprep.subr.mxu0 0.0
    %121 = vmatpush1.msra.mxu0 0.0
    %122 = vmatprep.subr.mxu0 0.0
    %123 = vmatpush1.msra.mxu0 0.0
    %124 = vmatprep.subr.mxu0 0.0
    %125 = vmatpush1.msra.mxu0 0.0
    %126 = vmatprep.subr.mxu0 0.0
    %127 = vmatpush1.msra.mxu0 0.0
    %128 = vmatprep.subr.mxu0 0.0
    %129 = vmatpush1.msra.mxu0 0.0
    %130 = vmatprep.subr.mxu0 0.0
    %131 = vmatpush1.msra.mxu0 0.0
    %132 = vmatprep.subr.mxu0 0.0
    %133 = vmatpush1.msra.mxu0 0.0
    %134 = vmatprep.subr.mxu0 0.0
    %135 = vmatpush1.msra.mxu0 0.0
    %136 = vmatprep.subr.mxu0 0.0
    %137 = vmatpush1.msra.mxu0 0.0
    %138 = vmatprep.mubr.f32.mxu0 0.0
    %v139 = vand.u32 %v41, 4294901760
    %v140 = vsub.f32 %v41, %v139
    %v141 = vand.u32 %v140, 4294901760
    %v142 = vsub.f32 %v140, %v141
    %v143 = vand.u32 %v142, 4294901760
    %144 = vmatmul.mubr.f32.gmra.mrb[0].mxu0 %v143
    %v145 = vpop.f32.mrb[0].mxu0
    %v146 = vadd.f32 0.0, %v145
    %v147 = vpop.f32.mrb[0].mxu0
    %148 = vdwg.mxu0
    %149 = vmatprep.subr.mxu0 0.0
    %v150 = vand.u32 %v42, 4294901760
    %v151 = vsub.f32 %v42, %v150
    %v152 = vand.u32 %v151, 4294901760
    %v153 = vsub.f32 %v151, %v152
    %v154 = vand.u32 %v153, 4294901760
    %155 = vmatpush1.msra.mxu0 %v154
    %156 = vmatprep.subr.mxu0 0.0
    %v157 = vand.u32 %v43, 4294901760
    %v158 = vsub.f32 %v43, %v157
    %v159 = vand.u32 %v158, 4294901760
    %v160 = vsub.f32 %v158, %v159
    %v161 = vand.u32 %v160, 4294901760
    %162 = vmatpush1.msra.mxu0 %v161
    %163 = vmatprep.subr.mxu0 0.0
    %v164 = vand.u32 %v44, 4294901760
    %v165 = vsub.f32 %v44, %v164
    %v166 = vand.u32 %v165, 4294901760
    %v167 = vsub.f32 %v165, %v166
    %v168 = vand.u32 %v167, 4294901760
    %169 = vmatpush1.msra.mxu0 %v168
    %170 = vmatprep.subr.mxu0 0.0
    %v171 = vand.u32 %v45, 4294901760
    %v172 = vsub.f32 %v45, %v171
    %v173 = vand.u32 %v172, 4294901760
    %v174 = vsub.f32 %v172, %v173
    %v175 = vand.u32 %v174, 4294901760
    %176 = vmatpush1.msra.mxu0 %v175
    %177 = vmatprep.subr.mxu0 0.0
    %v178 = vand.u32 %v46, 4294901760
    %v179 = vsub.f32 %v46, %v178
    %v180 = vand.u32 %v179, 4294901760
    %v181 = vsub.f32 %v179, %v180
    %v182 = vand.u32 %v181, 4294901760
    %183 = vmatpush1.msra.mxu0 %v182
    %184 = vmatprep.subr.mxu0 0.0
    %v185 = vand.u32 %v47, 4294901760
    %v186 = vsub.f32 %v47, %v185
    %v187 = vand.u32 %v186, 4294901760
    %v188 = vsub.f32 %v186, %v187
    %v189 = vand.u32 %v188, 4294901760
    %190 = vmatpush1.msra.mxu0 %v189
    %191 = vmatprep.subr.mxu0 0.0
    %v192 = vand.u32 %v48, 4294901760
    %v193 = vsub.f32 %v48, %v192
    %v194 = vand.u32 %v193, 4294901760
    %v195 = vsub.f32 %v193, %v194
    %v196 = vand.u32 %v195, 4294901760
    %197 = vmatpush1.msra.mxu0 %v196
    %198 = vmatprep.subr.mxu0 0.0
    %v199 = vand.u32 %v49, 4294901760
    %v200 = vsub.f32 %v49, %v199
    %v201 = vand.u32 %v200, 4294901760
    %v202 = vsub.f32 %v200, %v201
    %v203 = vand.u32 %v202, 4294901760
    %204 = vmatpush1.msra.mxu0 %v203
    %205 = vmatprep.subr.mxu0 0.0
    %v206 = vand.u32 %v50, 4294901760
    %v207 = vsub.f32 %v50, %v206
    %v208 = vand.u32 %v207, 4294901760
    %v209 = vsub.f32 %v207, %v208
    %v210 = vand.u32 %v209, 4294901760
    %211 = vmatpush1.msra.mxu0 %v210
    %212 = vmatprep.subr.mxu0 0.0
    %v213 = vand.u32 %v51, 4294901760
    %v214 = vsub.f32 %v51, %v213
    %v215 = vand.u32 %v214, 4294901760
    %v216 = vsub.f32 %v214, %v215
    %v217 = vand.u32 %v216, 4294901760
    %218 = vmatpush1.msra.mxu0 %v217
    %219 = vmatprep.subr.mxu0 0.0
    %v220 = vand.u32 %v52, 4294901760
    %v221 = vsub.f32 %v52, %v220
    %v222 = vand.u32 %v221, 4294901760
    %v223 = vsub.f32 %v221, %v222
    %v224 = vand.u32 %v223, 4294901760
    %225 = vmatpush1.msra.mxu0 %v224
    %226 = vmatprep.subr.mxu0 0.0
    %v227 = vand.u32 %v53, 4294901760
    %v228 = vsub.f32 %v53, %v227
    %v229 = vand.u32 %v228, 4294901760
    %v230 = vsub.f32 %v228, %v229
    %v231 = vand.u32 %v230, 4294901760
    %232 = vmatpush1.msra.mxu0 %v231
    %233 = vmatprep.subr.mxu0 0.0
    %v234 = vand.u32 %v54, 4294901760
    %v235 = vsub.f32 %v54, %v234
    %v236 = vand.u32 %v235, 4294901760
    %v237 = vsub.f32 %v235, %v236
    %v238 = vand.u32 %v237, 4294901760
    %239 = vmatpush1.msra.mxu0 %v238
    %240 = vmatprep.subr.mxu0 0.0
    %v241 = vand.u32 %v55, 4294901760
    %v242 = vsub.f32 %v55, %v241
    %v243 = vand.u32 %v242, 4294901760
    %v244 = vsub.f32 %v242, %v243
    %v245 = vand.u32 %v244, 4294901760
    %246 = vmatpush1.msra.mxu0 %v245
    %247 = vmatprep.subr.mxu0 0.0
    %v248 = vand.u32 %v56, 4294901760
    %v249 = vsub.f32 %v56, %v248
    %v250 = vand.u32 %v249, 4294901760
    %v251 = vsub.f32 %v249, %v250
    %v252 = vand.u32 %v251, 4294901760
    %253 = vmatpush1.msra.mxu0 %v252
    %254 = vmatprep.subr.mxu0 0.0
    %v255 = vand.u32 %v57, 4294901760
    %v256 = vsub.f32 %v57, %v255
    %v257 = vand.u32 %v256, 4294901760
    %v258 = vsub.f32 %v256, %v257
    %v259 = vand.u32 %v258, 4294901760
    %260 = vmatpush1.msra.mxu0 %v259
    %261 = vmatprep.subr.mxu0 0.0
    %262 = vmatpush1.msra.mxu0 0.0
    %263 = vmatprep.subr.mxu0 0.0
    %264 = vmatpush1.msra.mxu0 0.0
    %265 = vmatprep.subr.mxu0 0.0
    %266 = vmatpush1.msra.mxu0 0.0
    %267 = vmatprep.subr.mxu0 0.0
    %268 = vmatpush1.msra.mxu0 0.0
    %269 = vmatprep.subr.mxu0 0.0
    %270 = vmatpush1.msra.mxu0 0.0
    %271 = vmatprep.subr.mxu0 0.0
    %272 = vmatpush1.msra.mxu0 0.0
    %273 = vmatprep.subr.mxu0 0.0
    %274 = vmatpush1.msra.mxu0 0.0
    %275 = vmatprep.subr.mxu0 0.0
    %276 = vmatpush1.msra.mxu0 0.0
    %277 = vmatprep.subr.mxu0 0.0
    %278 = vmatpush1.msra.mxu0 0.0
    %279 = vmatprep.subr.mxu0 0.0
    %280 = vmatpush1.msra.mxu0 0.0
    %281 = vmatprep.subr.mxu0 0.0
    %282 = vmatpush1.msra.mxu0 0.0
    %283 = vmatprep.subr.mxu0 0.0
    %284 = vmatpush1.msra.mxu0 0.0
    %285 = vmatprep.subr.mxu0 0.0
    %286 = vmatpush1.msra.mxu0 0.0
    %287 = vmatprep.subr.mxu0 0.0
    %288 = vmatpush1.msra.mxu0 0.0
    %289 = vmatprep.subr.mxu0 0.0
    %290 = vmatpush1.msra.mxu0 0.0
    %291 = vmatprep.subr.mxu0 0.0
    %292 = vmatpush1.msra.mxu0 0.0
    %293 = vmatprep.mubr.f32.mxu0 0.0
    %v294 = vand.u32 %v41, 4294901760
    %295 = vmatmul.mubr.f32.gmra.mrb[0].mxu0 %v294
    %v296 = vpop.f32.mrb[0].mxu0
    %v297 = vadd.f32 %v146, %v296
    %v298 = vpop.f32.mrb[0].mxu0
    %299 = vdwg.mxu0
    %300 = vmatprep.subr.mxu0 0.0
    %v301 = vand.u32 %v42, 4294901760
    %v302 = vsub.f32 %v42, %v301
    %303 = vmatpush1.msra.mxu0 %v302
    %304 = vmatprep.subr.mxu0 0.0
    %v305 = vand.u32 %v43, 4294901760
    %v306 = vsub.f32 %v43, %v305
    %307 = vmatpush1.msra.mxu0 %v306
    %308 = vmatprep.subr.mxu0 0.0
    %v309 = vand.u32 %v44, 4294901760
    %v310 = vsub.f32 %v44, %v309
    %311 = vmatpush1.msra.mxu0 %v310
    %312 = vmatprep.subr.mxu0 0.0
    %v313 = vand.u32 %v45, 4294901760
    %v314 = vsub.f32 %v45, %v313
    %315 = vmatpush1.msra.mxu0 %v314
    %316 = vmatprep.subr.mxu0 0.0
    %v317 = vand.u32 %v46, 4294901760
    %v318 = vsub.f32 %v46, %v317
    %319 = vmatpush1.msra.mxu0 %v318
    %320 = vmatprep.subr.mxu0 0.0
    %v321 = vand.u32 %v47, 4294901760
    %v322 = vsub.f32 %v47, %v321
    %323 = vmatpush1.msra.mxu0 %v322
    %324 = vmatprep.subr.mxu0 0.0
    %v325 = vand.u32 %v48, 4294901760
    %v326 = vsub.f32 %v48, %v325
    %327 = vmatpush1.msra.mxu0 %v326
    %328 = vmatprep.subr.mxu0 0.0
    %v329 = vand.u32 %v49, 4294901760
    %v330 = vsub.f32 %v49, %v329
    %331 = vmatpush1.msra.mxu0 %v330
    %332 = vmatprep.subr.mxu0 0.0
    %v333 = vand.u32 %v50, 4294901760
    %v334 = vsub.f32 %v50, %v333
    %335 = vmatpush1.msra.mxu0 %v334
    %336 = vmatprep.subr.mxu0 0.0
    %v337 = vand.u32 %v51, 4294901760
    %v338 = vsub.f32 %v51, %v337
    %339 = vmatpush1.msra.mxu0 %v338
    %340 = vmatprep.subr.mxu0 0.0
    %v341 = vand.u32 %v52, 4294901760
    %v342 = vsub.f32 %v52, %v341
    %343 = vmatpush1.msra.mxu0 %v342
    %344 = vmatprep.subr.mxu0 0.0
    %v345 = vand.u32 %v53, 4294901760
    %v346 = vsub.f32 %v53, %v345
    %347 = vmatpush1.msra.mxu0 %v346
    %348 = vmatprep.subr.mxu0 0.0
    %v349 = vand.u32 %v54, 4294901760
    %v350 = vsub.f32 %v54, %v349
    %351 = vmatpush1.msra.mxu0 %v350
    %352 = vmatprep.subr.mxu0 0.0
    %v353 = vand.u32 %v55, 4294901760
    %v354 = vsub.f32 %v55, %v353
    %355 = vmatpush1.msra.mxu0 %v354
    %356 = vmatprep.subr.mxu0 0.0
    %v357 = vand.u32 %v56, 4294901760
    %v358 = vsub.f32 %v56, %v357
    %359 = vmatpush1.msra.mxu0 %v358
    %360 = vmatprep.subr.mxu0 0.0
    %v361 = vand.u32 %v57, 4294901760
    %v362 = vsub.f32 %v57, %v361
    %363 = vmatpush1.msra.mxu0 %v362
    %364 = vmatprep.subr.mxu0 0.0
    %365 = vmatpush1.msra.mxu0 0.0
    %366 = vmatprep.subr.mxu0 0.0
    %367 = vmatpush1.msra.mxu0 0.0
    %368 = vmatprep.subr.mxu0 0.0
    %369 = vmatpush1.msra.mxu0 0.0
    %370 = vmatprep.subr.mxu0 0.0
    %371 = vmatpush1.msra.mxu0 0.0
    %372 = vmatprep.subr.mxu0 0.0
    %373 = vmatpush1.msra.mxu0 0.0
    %374 = vmatprep.subr.mxu0 0.0
    %375 = vmatpush1.msra.mxu0 0.0
    %376 = vmatprep.subr.mxu0 0.0
    %377 = vmatpush1.msra.mxu0 0.0
    %378 = vmatprep.subr.mxu0 0.0
    %379 = vmatpush1.msra.mxu0 0.0
    %380 = vmatprep.subr.mxu0 0.0
    %381 = vmatpush1.msra.mxu0 0.0
    %382 = vmatprep.subr.mxu0 0.0
    %383 = vmatpush1.msra.mxu0 0.0
    %384 = vmatprep.subr.mxu0 0.0
    %385 = vmatpush1.msra.mxu0 0.0
    %386 = vmatprep.subr.mxu0 0.0
    %387 = vmatpush1.msra.mxu0 0.0
    %388 = vmatprep.subr.mxu0 0.0
    %389 = vmatpush1.msra.mxu0 0.0
    %390 = vmatprep.subr.mxu0 0.0
    %391 = vmatpush1.msra.mxu0 0.0
    %392 = vmatprep.subr.mxu0 0.0
    %393 = vmatpush1.msra.mxu0 0.0
    %394 = vmatprep.subr.mxu0 0.0
    %395 = vmatpush1.msra.mxu0 0.0
    %396 = vmatprep.mubr.f32.mxu0 0.0
    %v397 = vand.u32 %v41, 4294901760
    %v398 = vsub.f32 %v41, %v397
    %399 = vmatmul.mubr.f32.gmra.mrb[0].mxu0 %v398
    %v400 = vpop.f32.mrb[0].mxu0
    %v401 = vadd.f32 %v297, %v400
    %v402 = vpop.f32.mrb[0].mxu0
    %403 = vdwg.mxu0
    %404 = vmatprep.subr.mxu0 0.0
    %v405 = vand.u32 %v42, 4294901760
    %406 = vmatpush1.msra.mxu0 %v405
    %407 = vmatprep.subr.mxu0 0.0
    %v408 = vand.u32 %v43, 4294901760
    %409 = vmatpush1.msra.mxu0 %v408
    %410 = vmatprep.subr.mxu0 0.0
    %v411 = vand.u32 %v44, 4294901760
    %412 = vmatpush1.msra.mxu0 %v411
    %413 = vmatprep.subr.mxu0 0.0
    %v414 = vand.u32 %v45, 4294901760
    %415 = vmatpush1.msra.mxu0 %v414
    %416 = vmatprep.subr.mxu0 0.0
    %v417 = vand.u32 %v46, 4294901760
    %418 = vmatpush1.msra.mxu0 %v417
    %419 = vmatprep.subr.mxu0 0.0
    %v420 = vand.u32 %v47, 4294901760
    %421 = vmatpush1.msra.mxu0 %v420
    %422 = vmatprep.subr.mxu0 0.0
    %v423 = vand.u32 %v48, 4294901760
    %424 = vmatpush1.msra.mxu0 %v423
    %425 = vmatprep.subr.mxu0 0.0
    %v426 = vand.u32 %v49, 4294901760
    %427 = vmatpush1.msra.mxu0 %v426
    %428 = vmatprep.subr.mxu0 0.0
    %v429 = vand.u32 %v50, 4294901760
    %430 = vmatpush1.msra.mxu0 %v429
    %431 = vmatprep.subr.mxu0 0.0
    %v432 = vand.u32 %v51, 4294901760
    %433 = vmatpush1.msra.mxu0 %v432
    %434 = vmatprep.subr.mxu0 0.0
    %v435 = vand.u32 %v52, 4294901760
    %436 = vmatpush1.msra.mxu0 %v435
    %437 = vmatprep.subr.mxu0 0.0
    %v438 = vand.u32 %v53, 4294901760
    %439 = vmatpush1.msra.mxu0 %v438
    %440 = vmatprep.subr.mxu0 0.0
    %v441 = vand.u32 %v54, 4294901760
    %442 = vmatpush1.msra.mxu0 %v441
    %443 = vmatprep.subr.mxu0 0.0
    %v444 = vand.u32 %v55, 4294901760
    %445 = vmatpush1.msra.mxu0 %v444
    %446 = vmatprep.subr.mxu0 0.0
    %v447 = vand.u32 %v56, 4294901760
    %448 = vmatpush1.msra.mxu0 %v447
    %449 = vmatprep.subr.mxu0 0.0
    %v450 = vand.u32 %v57, 4294901760
    %451 = vmatpush1.msra.mxu0 %v450
    %452 = vmatprep.subr.mxu0 0.0
    %453 = vmatpush1.msra.mxu0 0.0
    %454 = vmatprep.subr.mxu0 0.0
    %455 = vmatpush1.msra.mxu0 0.0
    %456 = vmatprep.subr.mxu0 0.0
    %457 = vmatpush1.msra.mxu0 0.0
    %458 = vmatprep.subr.mxu0 0.0
    %459 = vmatpush1.msra.mxu0 0.0
    %460 = vmatprep.subr.mxu0 0.0
    %461 = vmatpush1.msra.mxu0 0.0
    %462 = vmatprep.subr.mxu0 0.0
    %463 = vmatpush1.msra.mxu0 0.0
    %464 = vmatprep.subr.mxu0 0.0
    %465 = vmatpush1.msra.mxu0 0.0
    %466 = vmatprep.subr.mxu0 0.0
    %467 = vmatpush1.msra.mxu0 0.0
    %468 = vmatprep.subr.mxu0 0.0
    %469 = vmatpush1.msra.mxu0 0.0
    %470 = vmatprep.subr.mxu0 0.0
    %471 = vmatpush1.msra.mxu0 0.0
    %472 = vmatprep.subr.mxu0 0.0
    %473 = vmatpush1.msra.mxu0 0.0
    %474 = vmatprep.subr.mxu0 0.0
    %475 = vmatpush1.msra.mxu0 0.0
    %476 = vmatprep.subr.mxu0 0.0
    %477 = vmatpush1.msra.mxu0 0.0
    %478 = vmatprep.subr.mxu0 0.0
    %479 = vmatpush1.msra.mxu0 0.0
    %480 = vmatprep.subr.mxu0 0.0
    %481 = vmatpush1.msra.mxu0 0.0
    %482 = vmatprep.subr.mxu0 0.0
    %483 = vmatpush1.msra.mxu0 0.0
    %484 = vmatprep.mubr.f32.mxu0 0.0
    %v485 = vand.u32 %v41, 4294901760
    %v486 = vsub.f32 %v41, %v485
    %v487 = vand.u32 %v486, 4294901760
    %488 = vmatmul.mubr.f32.gmra.mrb[0].mxu0 %v487
    %v489 = vpop.f32.mrb[0].mxu0
    %v490 = vadd.f32 %v401, %v489
    %v491 = vpop.f32.mrb[0].mxu0
    %492 = vdwg.mxu0
    %493 = vmatprep.subr.mxu0 0.0
    %v494 = vand.u32 %v42, 4294901760
    %v495 = vsub.f32 %v42, %v494
    %v496 = vand.u32 %v495, 4294901760
    %497 = vmatpush1.msra.mxu0 %v496
    %498 = vmatprep.subr.mxu0 0.0
    %v499 = vand.u32 %v43, 4294901760
    %v500 = vsub.f32 %v43, %v499
    %v501 = vand.u32 %v500, 4294901760
    %502 = vmatpush1.msra.mxu0 %v501
    %503 = vmatprep.subr.mxu0 0.0
    %v504 = vand.u32 %v44, 4294901760
    %v505 = vsub.f32 %v44, %v504
    %v506 = vand.u32 %v505, 4294901760
    %507 = vmatpush1.msra.mxu0 %v506
    %508 = vmatprep.subr.mxu0 0.0
    %v509 = vand.u32 %v45, 4294901760
    %v510 = vsub.f32 %v45, %v509
    %v511 = vand.u32 %v510, 4294901760
    %512 = vmatpush1.msra.mxu0 %v511
    %513 = vmatprep.subr.mxu0 0.0
    %v514 = vand.u32 %v46, 4294901760
    %v515 = vsub.f32 %v46, %v514
    %v516 = vand.u32 %v515, 4294901760
    %517 = vmatpush1.msra.mxu0 %v516
    %518 = vmatprep.subr.mxu0 0.0
    %v519 = vand.u32 %v47, 4294901760
    %v520 = vsub.f32 %v47, %v519
    %v521 = vand.u32 %v520, 4294901760
    %522 = vmatpush1.msra.mxu0 %v521
    %523 = vmatprep.subr.mxu0 0.0
    %v524 = vand.u32 %v48, 4294901760
    %v525 = vsub.f32 %v48, %v524
    %v526 = vand.u32 %v525, 4294901760
    %527 = vmatpush1.msra.mxu0 %v526
    %528 = vmatprep.subr.mxu0 0.0
    %v529 = vand.u32 %v49, 4294901760
    %v530 = vsub.f32 %v49, %v529
    %v531 = vand.u32 %v530, 4294901760
    %532 = vmatpush1.msra.mxu0 %v531
    %533 = vmatprep.subr.mxu0 0.0
    %v534 = vand.u32 %v50, 4294901760
    %v535 = vsub.f32 %v50, %v534
    %v536 = vand.u32 %v535, 4294901760
    %537 = vmatpush1.msra.mxu0 %v536
    %538 = vmatprep.subr.mxu0 0.0
    %v539 = vand.u32 %v51, 4294901760
    %v540 = vsub.f32 %v51, %v539
    %v541 = vand.u32 %v540, 4294901760
    %542 = vmatpush1.msra.mxu0 %v541
    %543 = vmatprep.subr.mxu0 0.0
    %v544 = vand.u32 %v52, 4294901760
    %v545 = vsub.f32 %v52, %v544
    %v546 = vand.u32 %v545, 4294901760
    %547 = vmatpush1.msra.mxu0 %v546
    %548 = vmatprep.subr.mxu0 0.0
    %v549 = vand.u32 %v53, 4294901760
    %v550 = vsub.f32 %v53, %v549
    %v551 = vand.u32 %v550, 4294901760
    %552 = vmatpush1.msra.mxu0 %v551
    %553 = vmatprep.subr.mxu0 0.0
    %v554 = vand.u32 %v54, 4294901760
    %v555 = vsub.f32 %v54, %v554
    %v556 = vand.u32 %v555, 4294901760
    %557 = vmatpush1.msra.mxu0 %v556
    %558 = vmatprep.subr.mxu0 0.0
    %v559 = vand.u32 %v55, 4294901760
    %v560 = vsub.f32 %v55, %v559
    %v561 = vand.u32 %v560, 4294901760
    %562 = vmatpush1.msra.mxu0 %v561
    %563 = vmatprep.subr.mxu0 0.0
    %v564 = vand.u32 %v56, 4294901760
    %v565 = vsub.f32 %v56, %v564
    %v566 = vand.u32 %v565, 4294901760
    %567 = vmatpush1.msra.mxu0 %v566
    %568 = vmatprep.subr.mxu0 0.0
    %v569 = vand.u32 %v57, 4294901760
    %v570 = vsub.f32 %v57, %v569
    %v571 = vand.u32 %v570, 4294901760
    %572 = vmatpush1.msra.mxu0 %v571
    %573 = vmatprep.subr.mxu0 0.0
    %574 = vmatpush1.msra.mxu0 0.0
    %575 = vmatprep.subr.mxu0 0.0
    %576 = vmatpush1.msra.mxu0 0.0
    %577 = vmatprep.subr.mxu0 0.0
    %578 = vmatpush1.msra.mxu0 0.0
    %579 = vmatprep.subr.mxu0 0.0
    %580 = vmatpush1.msra.mxu0 0.0
    %581 = vmatprep.subr.mxu0 0.0
    %582 = vmatpush1.msra.mxu0 0.0
    %583 = vmatprep.subr.mxu0 0.0
    %584 = vmatpush1.msra.mxu0 0.0
    %585 = vmatprep.subr.mxu0 0.0
    %586 = vmatpush1.msra.mxu0 0.0
    %587 = vmatprep.subr.mxu0 0.0
    %588 = vmatpush1.msra.mxu0 0.0
    %589 = vmatprep.subr.mxu0 0.0
    %590 = vmatpush1.msra.mxu0 0.0
    %591 = vmatprep.subr.mxu0 0.0
    %592 = vmatpush1.msra.mxu0 0.0
    %593 = vmatprep.subr.mxu0 0.0
    %594 = vmatpush1.msra.mxu0 0.0
    %595 = vmatprep.subr.mxu0 0.0
    %596 = vmatpush1.msra.mxu0 0.0
    %597 = vmatprep.subr.mxu0 0.0
    %598 = vmatpush1.msra.mxu0 0.0
    %599 = vmatprep.subr.mxu0 0.0
    %600 = vmatpush1.msra.mxu0 0.0
    %601 = vmatprep.subr.mxu0 0.0
    %602 = vmatpush1.msra.mxu0 0.0
    %603 = vmatprep.subr.mxu0 0.0
    %604 = vmatpush1.msra.mxu0 0.0
    %605 = vmatprep.mubr.f32.mxu0 0.0
    %v606 = vand.u32 %v41, 4294901760
    %607 = vmatmul.mubr.f32.gmra.mrb[0].mxu0 %v606
    %v608 = vpop.f32.mrb[0].mxu0
    %v609 = vadd.f32 %v490, %v608
    %v610 = vpop.f32.mrb[0].mxu0
    %611 = vdwg.mxu0
    %612 = vmatprep.subr.mxu0 0.0
    %v613 = vand.u32 %v42, 4294901760
    %614 = vmatpush1.msra.mxu0 %v613
    %615 = vmatprep.subr.mxu0 0.0
    %v616 = vand.u32 %v43, 4294901760
    %617 = vmatpush1.msra.mxu0 %v616
    %618 = vmatprep.subr.mxu0 0.0
    %v619 = vand.u32 %v44, 4294901760
    %620 = vmatpush1.msra.mxu0 %v619
    %621 = vmatprep.subr.mxu0 0.0
    %v622 = vand.u32 %v45, 4294901760
    %623 = vmatpush1.msra.mxu0 %v622
    %624 = vmatprep.subr.mxu0 0.0
    %v625 = vand.u32 %v46, 4294901760
    %626 = vmatpush1.msra.mxu0 %v625
    %627 = vmatprep.subr.mxu0 0.0
    %v628 = vand.u32 %v47, 4294901760
    %629 = vmatpush1.msra.mxu0 %v628
    %630 = vmatprep.subr.mxu0 0.0
    %v631 = vand.u32 %v48, 4294901760
    %632 = vmatpush1.msra.mxu0 %v631
    %633 = vmatprep.subr.mxu0 0.0
    %v634 = vand.u32 %v49, 4294901760
    %635 = vmatpush1.msra.mxu0 %v634
    %636 = vmatprep.subr.mxu0 0.0
    %v637 = vand.u32 %v50, 4294901760
    %638 = vmatpush1.msra.mxu0 %v637
    %639 = vmatprep.subr.mxu0 0.0
    %v640 = vand.u32 %v51, 4294901760
    %641 = vmatpush1.msra.mxu0 %v640
    %642 = vmatprep.subr.mxu0 0.0
    %v643 = vand.u32 %v52, 4294901760
    %644 = vmatpush1.msra.mxu0 %v643
    %645 = vmatprep.subr.mxu0 0.0
    %v646 = vand.u32 %v53, 4294901760
    %647 = vmatpush1.msra.mxu0 %v646
    %648 = vmatprep.subr.mxu0 0.0
    %v649 = vand.u32 %v54, 4294901760
    %650 = vmatpush1.msra.mxu0 %v649
    %651 = vmatprep.subr.mxu0 0.0
    %v652 = vand.u32 %v55, 4294901760
    %653 = vmatpush1.msra.mxu0 %v652
    %654 = vmatprep.subr.mxu0 0.0
    %v655 = vand.u32 %v56, 4294901760
    %656 = vmatpush1.msra.mxu0 %v655
    %657 = vmatprep.subr.mxu0 0.0
    %v658 = vand.u32 %v57, 4294901760
    %659 = vmatpush1.msra.mxu0 %v658
    %660 = vmatprep.subr.mxu0 0.0
    %661 = vmatpush1.msra.mxu0 0.0
    %662 = vmatprep.subr.mxu0 0.0
    %663 = vmatpush1.msra.mxu0 0.0
    %664 = vmatprep.subr.mxu0 0.0
    %665 = vmatpush1.msra.mxu0 0.0
    %666 = vmatprep.subr.mxu0 0.0
    %667 = vmatpush1.msra.mxu0 0.0
    %668 = vmatprep.subr.mxu0 0.0
    %669 = vmatpush1.msra.mxu0 0.0
    %670 = vmatprep.subr.mxu0 0.0
    %671 = vmatpush1.msra.mxu0 0.0
    %672 = vmatprep.subr.mxu0 0.0
    %673 = vmatpush1.msra.mxu0 0.0
    %674 = vmatprep.subr.mxu0 0.0
    %675 = vmatpush1.msra.mxu0 0.0
    %676 = vmatprep.subr.mxu0 0.0
    %677 = vmatpush1.msra.mxu0 0.0
    %678 = vmatprep.subr.mxu0 0.0
    %679 = vmatpush1.msra.mxu0 0.0
    %680 = vmatprep.subr.mxu0 0.0
    %681 = vmatpush1.msra.mxu0 0.0
    %682 = vmatprep.subr.mxu0 0.0
    %683 = vmatpush1.msra.mxu0 0.0
    %684 = vmatprep.subr.mxu0 0.0
    %685 = vmatpush1.msra.mxu0 0.0
    %686 = vmatprep.subr.mxu0 0.0
    %687 = vmatpush1.msra.mxu0 0.0
    %688 = vmatprep.subr.mxu0 0.0
    %689 = vmatpush1.msra.mxu0 0.0
    %690 = vmatprep.subr.mxu0 0.0
    %691 = vmatpush1.msra.mxu0 0.0
    %692 = vmatprep.mubr.f32.mxu0 0.0
    %v693 = vand.u32 %v41, 4294901760
    %694 = vmatmul.mubr.f32.gmra.mrb[0].mxu0 %v693
    %v695 = vpop.f32.mrb[0].mxu0
    %v696 = vadd.f32 %v609, %v695
    %v697 = vpop.f32.mrb[0].mxu0
    %698 = vdwg.mxu0
    %v699 = vsub.f32 %v41, %v696
    %v700 = vmul.f32 %v699, %v699
    %701 = vmatprep.subr.mxu0 0.0
    %v702 = vand.u32 %v42, 4294901760
    %703 = vmatpush1.msra.mxu0 %v702
    %704 = vmatprep.subr.mxu0 0.0
    %v705 = vand.u32 %v43, 4294901760
    %706 = vmatpush1.msra.mxu0 %v705
    %707 = vmatprep.subr.mxu0 0.0
    %v708 = vand.u32 %v44, 4294901760
    %709 = vmatpush1.msra.mxu0 %v708
    %710 = vmatprep.subr.mxu0 0.0
    %v711 = vand.u32 %v45, 4294901760
    %712 = vmatpush1.msra.mxu0 %v711
    %713 = vmatprep.subr.mxu0 0.0
    %v714 = vand.u32 %v46, 4294901760
    %715 = vmatpush1.msra.mxu0 %v714
    %716 = vmatprep.subr.mxu0 0.0
    %v717 = vand.u32 %v47, 4294901760
    %718 = vmatpush1.msra.mxu0 %v717
    %719 = vmatprep.subr.mxu0 0.0
    %v720 = vand.u32 %v48, 4294901760
    %721 = vmatpush1.msra.mxu0 %v720
    %722 = vmatprep.subr.mxu0 0.0
    %v723 = vand.u32 %v49, 4294901760
    %724 = vmatpush1.msra.mxu0 %v723
    %725 = vmatprep.subr.mxu0 0.0
    %v726 = vand.u32 %v50, 4294901760
    %727 = vmatpush1.msra.mxu0 %v726
    %728 = vmatprep.subr.mxu0 0.0
    %v729 = vand.u32 %v51, 4294901760
    %730 = vmatpush1.msra.mxu0 %v729
    %731 = vmatprep.subr.mxu0 0.0
    %v732 = vand.u32 %v52, 4294901760
    %733 = vmatpush1.msra.mxu0 %v732
    %734 = vmatprep.subr.mxu0 0.0
    %v735 = vand.u32 %v53, 4294901760
    %736 = vmatpush1.msra.mxu0 %v735
    %737 = vmatprep.subr.mxu0 0.0
    %v738 = vand.u32 %v54, 4294901760
    %739 = vmatpush1.msra.mxu0 %v738
    %740 = vmatprep.subr.mxu0 0.0
    %v741 = vand.u32 %v55, 4294901760
    %742 = vmatpush1.msra.mxu0 %v741
    %743 = vmatprep.subr.mxu0 0.0
    %v744 = vand.u32 %v56, 4294901760
    %745 = vmatpush1.msra.mxu0 %v744
    %746 = vmatprep.subr.mxu0 0.0
    %v747 = vand.u32 %v57, 4294901760
    %748 = vmatpush1.msra.mxu0 %v747
    %749 = vmatprep.subr.mxu0 0.0
    %750 = vmatpush1.msra.mxu0 0.0
    %751 = vmatprep.subr.mxu0 0.0
    %752 = vmatpush1.msra.mxu0 0.0
    %753 = vmatprep.subr.mxu0 0.0
    %754 = vmatpush1.msra.mxu0 0.0
    %755 = vmatprep.subr.mxu0 0.0
    %756 = vmatpush1.msra.mxu0 0.0
    %757 = vmatprep.subr.mxu0 0.0
    %758 = vmatpush1.msra.mxu0 0.0
    %759 = vmatprep.subr.mxu0 0.0
    %760 = vmatpush1.msra.mxu0 0.0
    %761 = vmatprep.subr.mxu0 0.0
    %762 = vmatpush1.msra.mxu0 0.0
    %763 = vmatprep.subr.mxu0 0.0
    %764 = vmatpush1.msra.mxu0 0.0
    %765 = vmatprep.subr.mxu0 0.0
    %766 = vmatpush1.msra.mxu0 0.0
    %767 = vmatprep.subr.mxu0 0.0
    %768 = vmatpush1.msra.mxu0 0.0
    %769 = vmatprep.subr.mxu0 0.0
    %770 = vmatpush1.msra.mxu0 0.0
    %771 = vmatprep.subr.mxu0 0.0
    %772 = vmatpush1.msra.mxu0 0.0
    %773 = vmatprep.subr.mxu0 0.0
    %774 = vmatpush1.msra.mxu0 0.0
    %775 = vmatprep.subr.mxu0 0.0
    %776 = vmatpush1.msra.mxu0 0.0
    %777 = vmatprep.subr.mxu0 0.0
    %778 = vmatpush1.msra.mxu0 0.0
    %779 = vmatprep.subr.mxu0 0.0
    %780 = vmatpush1.msra.mxu0 0.0
    %781 = vmatprep.mubr.f32.mxu0 0.0
    %v782 = vand.u32 %v700, 4294901760
    %v783 = vsub.f32 %v700, %v782
    %v784 = vand.u32 %v783, 4294901760
    %v785 = vsub.f32 %v783, %v784
    %v786 = vand.u32 %v785, 4294901760
    %787 = vmatmul.mubr.f32.gmra.mrb[0].mxu0 %v786
    %v788 = vpop.f32.mrb[0].mxu0
    %v789 = vadd.f32 1e-05, %v788
    %v790 = vpop.f32.mrb[0].mxu0
    %791 = vdwg.mxu0
    %792 = vmatprep.subr.mxu0 0.0
    %v793 = vand.u32 %v42, 4294901760
    %v794 = vsub.f32 %v42, %v793
    %v795 = vand.u32 %v794, 4294901760
    %v796 = vsub.f32 %v794, %v795
    %v797 = vand.u32 %v796, 4294901760
    %798 = vmatpush1.msra.mxu0 %v797
    %799 = vmatprep.subr.mxu0 0.0
    %v800 = vand.u32 %v43, 4294901760
    %v801 = vsub.f32 %v43, %v800
    %v802 = vand.u32 %v801, 4294901760
    %v803 = vsub.f32 %v801, %v802
    %v804 = vand.u32 %v803, 4294901760
    %805 = vmatpush1.msra.mxu0 %v804
    %806 = vmatprep.subr.mxu0 0.0
    %v807 = vand.u32 %v44, 4294901760
    %v808 = vsub.f32 %v44, %v807
    %v809 = vand.u32 %v808, 4294901760
    %v810 = vsub.f32 %v808, %v809
    %v811 = vand.u32 %v810, 4294901760
    %812 = vmatpush1.msra.mxu0 %v811
    %813 = vmatprep.subr.mxu0 0.0
    %v814 = vand.u32 %v45, 4294901760
    %v815 = vsub.f32 %v45, %v814
    %v816 = vand.u32 %v815, 4294901760
    %v817 = vsub.f32 %v815, %v816
    %v818 = vand.u32 %v817, 4294901760
    %819 = vmatpush1.msra.mxu0 %v818
    %820 = vmatprep.subr.mxu0 0.0
    %v821 = vand.u32 %v46, 4294901760
    %v822 = vsub.f32 %v46, %v821
    %v823 = vand.u32 %v822, 4294901760
    %v824 = vsub.f32 %v822, %v823
    %v825 = vand.u32 %v824, 4294901760
    %826 = vmatpush1.msra.mxu0 %v825
    %827 = vmatprep.subr.mxu0 0.0
    %v828 = vand.u32 %v47, 4294901760
    %v829 = vsub.f32 %v47, %v828
    %v830 = vand.u32 %v829, 4294901760
    %v831 = vsub.f32 %v829, %v830
    %v832 = vand.u32 %v831, 4294901760
    %833 = vmatpush1.msra.mxu0 %v832
    %834 = vmatprep.subr.mxu0 0.0
    %v835 = vand.u32 %v48, 4294901760
    %v836 = vsub.f32 %v48, %v835
    %v837 = vand.u32 %v836, 4294901760
    %v838 = vsub.f32 %v836, %v837
    %v839 = vand.u32 %v838, 4294901760
    %840 = vmatpush1.msra.mxu0 %v839
    %841 = vmatprep.subr.mxu0 0.0
    %v842 = vand.u32 %v49, 4294901760
    %v843 = vsub.f32 %v49, %v842
    %v844 = vand.u32 %v843, 4294901760
    %v845 = vsub.f32 %v843, %v844
    %v846 = vand.u32 %v845, 4294901760
    %847 = vmatpush1.msra.mxu0 %v846
    %848 = vmatprep.subr.mxu0 0.0
    %v849 = vand.u32 %v50, 4294901760
    %v850 = vsub.f32 %v50, %v849
    %v851 = vand.u32 %v850, 4294901760
    %v852 = vsub.f32 %v850, %v851
    %v853 = vand.u32 %v852, 4294901760
    %854 = vmatpush1.msra.mxu0 %v853
    %855 = vmatprep.subr.mxu0 0.0
    %v856 = vand.u32 %v51, 4294901760
    %v857 = vsub.f32 %v51, %v856
    %v858 = vand.u32 %v857, 4294901760
    %v859 = vsub.f32 %v857, %v858
    %v860 = vand.u32 %v859, 4294901760
    %861 = vmatpush1.msra.mxu0 %v860
    %862 = vmatprep.subr.mxu0 0.0
    %v863 = vand.u32 %v52, 4294901760
    %v864 = vsub.f32 %v52, %v863
    %v865 = vand.u32 %v864, 4294901760
    %v866 = vsub.f32 %v864, %v865
    %v867 = vand.u32 %v866, 4294901760
    %868 = vmatpush1.msra.mxu0 %v867
    %869 = vmatprep.subr.mxu0 0.0
    %v870 = vand.u32 %v53, 4294901760
    %v871 = vsub.f32 %v53, %v870
    %v872 = vand.u32 %v871, 4294901760
    %v873 = vsub.f32 %v871, %v872
    %v874 = vand.u32 %v873, 4294901760
    %875 = vmatpush1.msra.mxu0 %v874
    %876 = vmatprep.subr.mxu0 0.0
    %v877 = vand.u32 %v54, 4294901760
    %v878 = vsub.f32 %v54, %v877
    %v879 = vand.u32 %v878, 4294901760
    %v880 = vsub.f32 %v878, %v879
    %v881 = vand.u32 %v880, 4294901760
    %882 = vmatpush1.msra.mxu0 %v881
    %883 = vmatprep.subr.mxu0 0.0
    %v884 = vand.u32 %v55, 4294901760
    %v885 = vsub.f32 %v55, %v884
    %v886 = vand.u32 %v885, 4294901760
    %v887 = vsub.f32 %v885, %v886
    %v888 = vand.u32 %v887, 4294901760
    %889 = vmatpush1.msra.mxu0 %v888
    %890 = vmatprep.subr.mxu0 0.0
    %v891 = vand.u32 %v56, 4294901760
    %v892 = vsub.f32 %v56, %v891
    %v893 = vand.u32 %v892, 4294901760
    %v894 = vsub.f32 %v892, %v893
    %v895 = vand.u32 %v894, 4294901760
    %896 = vmatpush1.msra.mxu0 %v895
    %897 = vmatprep.subr.mxu0 0.0
    %v898 = vand.u32 %v57, 4294901760
    %v899 = vsub.f32 %v57, %v898
    %v900 = vand.u32 %v899, 4294901760
    %v901 = vsub.f32 %v899, %v900
    %v902 = vand.u32 %v901, 4294901760
    %903 = vmatpush1.msra.mxu0 %v902
    %904 = vmatprep.subr.mxu0 0.0
    %905 = vmatpush1.msra.mxu0 0.0
    %906 = vmatprep.subr.mxu0 0.0
    %907 = vmatpush1.msra.mxu0 0.0
    %908 = vmatprep.subr.mxu0 0.0
    %909 = vmatpush1.msra.mxu0 0.0
    %910 = vmatprep.subr.mxu0 0.0
    %911 = vmatpush1.msra.mxu0 0.0
    %912 = vmatprep.subr.mxu0 0.0
    %913 = vmatpush1.msra.mxu0 0.0
    %914 = vmatprep.subr.mxu0 0.0
    %915 = vmatpush1.msra.mxu0 0.0
    %916 = vmatprep.subr.mxu0 0.0
    %917 = vmatpush1.msra.mxu0 0.0
    %918 = vmatprep.subr.mxu0 0.0
    %919 = vmatpush1.msra.mxu0 0.0
    %920 = vmatprep.subr.mxu0 0.0
    %921 = vmatpush1.msra.mxu0 0.0
    %922 = vmatprep.subr.mxu0 0.0
    %923 = vmatpush1.msra.mxu0 0.0
    %924 = vmatprep.subr.mxu0 0.0
    %925 = vmatpush1.msra.mxu0 0.0
    %926 = vmatprep.subr.mxu0 0.0
    %927 = vmatpush1.msra.mxu0 0.0
    %928 = vmatprep.subr.mxu0 0.0
    %929 = vmatpush1.msra.mxu0 0.0
    %930 = vmatprep.subr.mxu0 0.0
    %931 = vmatpush1.msra.mxu0 0.0
    %932 = vmatprep.subr.mxu0 0.0
    %933 = vmatpush1.msra.mxu0 0.0
    %934 = vmatprep.subr.mxu0 0.0
    %935 = vmatpush1.msra.mxu0 0.0
    %936 = vmatprep.mubr.f32.mxu0 0.0
    %v937 = vand.u32 %v700, 4294901760
    %938 = vmatmul.mubr.f32.gmra.mrb[0].mxu0 %v937
    %v939 = vpop.f32.mrb[0].mxu0
    %v940 = vadd.f32 %v789, %v939
    %v941 = vpop.f32.mrb[0].mxu0
    %942 = vdwg.mxu0
    %943 = vmatprep.subr.mxu0 0.0
    %v944 = vand.u32 %v42, 4294901760
    %v945 = vsub.f32 %v42, %v944
    %946 = vmatpush1.msra.mxu0 %v945
    %947 = vmatprep.subr.mxu0 0.0
    %v948 = vand.u32 %v43, 4294901760
    %v949 = vsub.f32 %v43, %v948
    %950 = vmatpush1.msra.mxu0 %v949
    %951 = vmatprep.subr.mxu0 0.0
    %v952 = vand.u32 %v44, 4294901760
    %v953 = vsub.f32 %v44, %v952
    %954 = vmatpush1.msra.mxu0 %v953
    %955 = vmatprep.subr.mxu0 0.0
    %v956 = vand.u32 %v45, 4294901760
    %v957 = vsub.f32 %v45, %v956
    %958 = vmatpush1.msra.mxu0 %v957
    %959 = vmatprep.subr.mxu0 0.0
    %v960 = vand.u32 %v46, 4294901760
    %v961 = vsub.f32 %v46, %v960
    %962 = vmatpush1.msra.mxu0 %v961
    %963 = vmatprep.subr.mxu0 0.0
    %v964 = vand.u32 %v47, 4294901760
    %v965 = vsub.f32 %v47, %v964
    %966 = vmatpush1.msra.mxu0 %v965
    %967 = vmatprep.subr.mxu0 0.0
    %v968 = vand.u32 %v48, 4294901760
    %v969 = vsub.f32 %v48, %v968
    %970 = vmatpush1.msra.mxu0 %v969
    %971 = vmatprep.subr.mxu0 0.0
    %v972 = vand.u32 %v49, 4294901760
    %v973 = vsub.f32 %v49, %v972
    %974 = vmatpush1.msra.mxu0 %v973
    %975 = vmatprep.subr.mxu0 0.0
    %v976 = vand.u32 %v50, 4294901760
    %v977 = vsub.f32 %v50, %v976
    %978 = vmatpush1.msra.mxu0 %v977
    %979 = vmatprep.subr.mxu0 0.0
    %v980 = vand.u32 %v51, 4294901760
    %v981 = vsub.f32 %v51, %v980
    %982 = vmatpush1.msra.mxu0 %v981
    %983 = vmatprep.subr.mxu0 0.0
    %v984 = vand.u32 %v52, 4294901760
    %v985 = vsub.f32 %v52, %v984
    %986 = vmatpush1.msra.mxu0 %v985
    %987 = vmatprep.subr.mxu0 0.0
    %v988 = vand.u32 %v53, 4294901760
    %v989 = vsub.f32 %v53, %v988
    %990 = vmatpush1.msra.mxu0 %v989
    %991 = vmatprep.subr.mxu0 0.0
    %v992 = vand.u32 %v54, 4294901760
    %v993 = vsub.f32 %v54, %v992
    %994 = vmatpush1.msra.mxu0 %v993
    %995 = vmatprep.subr.mxu0 0.0
    %v996 = vand.u32 %v55, 4294901760
    %v997 = vsub.f32 %v55, %v996
    %998 = vmatpush1.msra.mxu0 %v997
    %999 = vmatprep.subr.mxu0 0.0
    %v1000 = vand.u32 %v56, 4294901760
    %v1001 = vsub.f32 %v56, %v1000
    %1002 = vmatpush1.msra.mxu0 %v1001
    %1003 = vmatprep.subr.mxu0 0.0
    %v1004 = vand.u32 %v57, 4294901760
    %v1005 = vsub.f32 %v57, %v1004
    %1006 = vmatpush1.msra.mxu0 %v1005
    %1007 = vmatprep.subr.mxu0 0.0
    %1008 = vmatpush1.msra.mxu0 0.0
    %1009 = vmatprep.subr.mxu0 0.0
    %1010 = vmatpush1.msra.mxu0 0.0
    %1011 = vmatprep.subr.mxu0 0.0
    %1012 = vmatpush1.msra.mxu0 0.0
    %1013 = vmatprep.subr.mxu0 0.0
    %1014 = vmatpush1.msra.mxu0 0.0
    %1015 = vmatprep.subr.mxu0 0.0
    %1016 = vmatpush1.msra.mxu0 0.0
    %1017 = vmatprep.subr.mxu0 0.0
    %1018 = vmatpush1.msra.mxu0 0.0
    %1019 = vmatprep.subr.mxu0 0.0
    %1020 = vmatpush1.msra.mxu0 0.0
    %1021 = vmatprep.subr.mxu0 0.0
    %1022 = vmatpush1.msra.mxu0 0.0
    %1023 = vmatprep.subr.mxu0 0.0
    %1024 = vmatpush1.msra.mxu0 0.0
    %1025 = vmatprep.subr.mxu0 0.0
    %1026 = vmatpush1.msra.mxu0 0.0
    %1027 = vmatprep.subr.mxu0 0.0
    %1028 = vmatpush1.msra.mxu0 0.0
    %1029 = vmatprep.subr.mxu0 0.0
    %1030 = vmatpush1.msra.mxu0 0.0
    %1031 = vmatprep.subr.mxu0 0.0
    %1032 = vmatpush1.msra.mxu0 0.0
    %1033 = vmatprep.subr.mxu0 0.0
    %1034 = vmatpush1.msra.mxu0 0.0
    %1035 = vmatprep.subr.mxu0 0.0
    %1036 = vmatpush1.msra.mxu0 0.0
    %1037 = vmatprep.subr.mxu0 0.0
    %1038 = vmatpush1.msra.mxu0 0.0
    %1039 = vmatprep.mubr.f32.mxu0 0.0
    %v1040 = vand.u32 %v700, 4294901760
    %v1041 = vsub.f32 %v700, %v1040
    %1042 = vmatmul.mubr.f32.gmra.mrb[0].mxu0 %v1041
    %v1043 = vpop.f32.mrb[0].mxu0
    %v1044 = vadd.f32 %v940, %v1043
    %v1045 = vpop.f32.mrb[0].mxu0
    %1046 = vdwg.mxu0
    %1047 = vmatprep.subr.mxu0 0.0
    %v1048 = vand.u32 %v42, 4294901760
    %1049 = vmatpush1.msra.mxu0 %v1048
    %1050 = vmatprep.subr.mxu0 0.0
    %v1051 = vand.u32 %v43, 4294901760
    %1052 = vmatpush1.msra.mxu0 %v1051
    %1053 = vmatprep.subr.mxu0 0.0
    %v1054 = vand.u32 %v44, 4294901760
    %1055 = vmatpush1.msra.mxu0 %v1054
    %1056 = vmatprep.subr.mxu0 0.0
    %v1057 = vand.u32 %v45, 4294901760
    %1058 = vmatpush1.msra.mxu0 %v1057
    %1059 = vmatprep.subr.mxu0 0.0
    %v1060 = vand.u32 %v46, 4294901760
    %1061 = vmatpush1.msra.mxu0 %v1060
    %1062 = vmatprep.subr.mxu0 0.0
    %v1063 = vand.u32 %v47, 4294901760
    %1064 = vmatpush1.msra.mxu0 %v1063
    %1065 = vmatprep.subr.mxu0 0.0
    %v1066 = vand.u32 %v48, 4294901760
    %1067 = vmatpush1.msra.mxu0 %v1066
    %1068 = vmatprep.subr.mxu0 0.0
    %v1069 = vand.u32 %v49, 4294901760
    %1070 = vmatpush1.msra.mxu0 %v1069
    %1071 = vmatprep.subr.mxu0 0.0
    %v1072 = vand.u32 %v50, 4294901760
    %1073 = vmatpush1.msra.mxu0 %v1072
    %1074 = vmatprep.subr.mxu0 0.0
    %v1075 = vand.u32 %v51, 4294901760
    %1076 = vmatpush1.msra.mxu0 %v1075
    %1077 = vmatprep.subr.mxu0 0.0
    %v1078 = vand.u32 %v52, 4294901760
    %1079 = vmatpush1.msra.mxu0 %v1078
    %1080 = vmatprep.subr.mxu0 0.0
    %v1081 = vand.u32 %v53, 4294901760
    %1082 = vmatpush1.msra.mxu0 %v1081
    %1083 = vmatprep.subr.mxu0 0.0
    %v1084 = vand.u32 %v54, 4294901760
    %1085 = vmatpush1.msra.mxu0 %v1084
    %1086 = vmatprep.subr.mxu0 0.0
    %v1087 = vand.u32 %v55, 4294901760
    %1088 = vmatpush1.msra.mxu0 %v1087
    %1089 = vmatprep.subr.mxu0 0.0
    %v1090 = vand.u32 %v56, 4294901760
    %1091 = vmatpush1.msra.mxu0 %v1090
    %1092 = vmatprep.subr.mxu0 0.0
    %v1093 = vand.u32 %v57, 4294901760
    %1094 = vmatpush1.msra.mxu0 %v1093
    %1095 = vmatprep.subr.mxu0 0.0
    %1096 = vmatpush1.msra.mxu0 0.0
    %1097 = vmatprep.subr.mxu0 0.0
    %1098 = vmatpush1.msra.mxu0 0.0
    %1099 = vmatprep.subr.mxu0 0.0
    %1100 = vmatpush1.msra.mxu0 0.0
    %1101 = vmatprep.subr.mxu0 0.0
    %1102 = vmatpush1.msra.mxu0 0.0
    %1103 = vmatprep.subr.mxu0 0.0
    %1104 = vmatpush1.msra.mxu0 0.0
    %1105 = vmatprep.subr.mxu0 0.0
    %1106 = vmatpush1.msra.mxu0 0.0
    %1107 = vmatprep.subr.mxu0 0.0
    %1108 = vmatpush1.msra.mxu0 0.0
    %1109 = vmatprep.subr.mxu0 0.0
    %1110 = vmatpush1.msra.mxu0 0.0
    %1111 = vmatprep.subr.mxu0 0.0
    %1112 = vmatpush1.msra.mxu0 0.0
    %1113 = vmatprep.subr.mxu0 0.0
    %1114 = vmatpush1.msra.mxu0 0.0
    %1115 = vmatprep.subr.mxu0 0.0
    %1116 = vmatpush1.msra.mxu0 0.0
    %1117 = vmatprep.subr.mxu0 0.0
    %1118 = vmatpush1.msra.mxu0 0.0
    %1119 = vmatprep.subr.mxu0 0.0
    %1120 = vmatpush1.msra.mxu0 0.0
    %1121 = vmatprep.subr.mxu0 0.0
    %1122 = vmatpush1.msra.mxu0 0.0
    %1123 = vmatprep.subr.mxu0 0.0
    %1124 = vmatpush1.msra.mxu0 0.0
    %1125 = vmatprep.subr.mxu0 0.0
    %1126 = vmatpush1.msra.mxu0 0.0
    %1127 = vmatprep.mubr.f32.mxu0 0.0
    %v1128 = vand.u32 %v700, 4294901760
    %v1129 = vsub.f32 %v700, %v1128
    %v1130 = vand.u32 %v1129, 4294901760
    %1131 = vmatmul.mubr.f32.gmra.mrb[0].mxu0 %v1130
    %v1132 = vpop.f32.mrb[0].mxu0
    %v1133 = vadd.f32 %v1044, %v1132
    %v1134 = vpop.f32.mrb[0].mxu0
    %1135 = vdwg.mxu0
    %1136 = vmatprep.subr.mxu0 0.0
    %v1137 = vand.u32 %v42, 4294901760
    %v1138 = vsub.f32 %v42, %v1137
    %v1139 = vand.u32 %v1138, 4294901760
    %1140 = vmatpush1.msra.mxu0 %v1139
    %1141 = vmatprep.subr.mxu0 0.0
    %v1142 = vand.u32 %v43, 4294901760
    %v1143 = vsub.f32 %v43, %v1142
    %v1144 = vand.u32 %v1143, 4294901760
    %1145 = vmatpush1.msra.mxu0 %v1144
    %1146 = vmatprep.subr.mxu0 0.0
    %v1147 = vand.u32 %v44, 4294901760
    %v1148 = vsub.f32 %v44, %v1147
    %v1149 = vand.u32 %v1148, 4294901760
    %1150 = vmatpush1.msra.mxu0 %v1149
    %1151 = vmatprep.subr.mxu0 0.0
    %v1152 = vand.u32 %v45, 4294901760
    %v1153 = vsub.f32 %v45, %v1152
    %v1154 = vand.u32 %v1153, 4294901760
    %1155 = vmatpush1.msra.mxu0 %v1154
    %1156 = vmatprep.subr.mxu0 0.0
    %v1157 = vand.u32 %v46, 4294901760
    %v1158 = vsub.f32 %v46, %v1157
    %v1159 = vand.u32 %v1158, 4294901760
    %1160 = vmatpush1.msra.mxu0 %v1159
    %1161 = vmatprep.subr.mxu0 0.0
    %v1162 = vand.u32 %v47, 4294901760
    %v1163 = vsub.f32 %v47, %v1162
    %v1164 = vand.u32 %v1163, 4294901760
    %1165 = vmatpush1.msra.mxu0 %v1164
    %1166 = vmatprep.subr.mxu0 0.0
    %v1167 = vand.u32 %v48, 4294901760
    %v1168 = vsub.f32 %v48, %v1167
    %v1169 = vand.u32 %v1168, 4294901760
    %1170 = vmatpush1.msra.mxu0 %v1169
    %1171 = vmatprep.subr.mxu0 0.0
    %v1172 = vand.u32 %v49, 4294901760
    %v1173 = vsub.f32 %v49, %v1172
    %v1174 = vand.u32 %v1173, 4294901760
    %1175 = vmatpush1.msra.mxu0 %v1174
    %1176 = vmatprep.subr.mxu0 0.0
    %v1177 = vand.u32 %v50, 4294901760
    %v1178 = vsub.f32 %v50, %v1177
    %v1179 = vand.u32 %v1178, 4294901760
    %1180 = vmatpush1.msra.mxu0 %v1179
    %1181 = vmatprep.subr.mxu0 0.0
    %v1182 = vand.u32 %v51, 4294901760
    %v1183 = vsub.f32 %v51, %v1182
    %v1184 = vand.u32 %v1183, 4294901760
    %1185 = vmatpush1.msra.mxu0 %v1184
    %1186 = vmatprep.subr.mxu0 0.0
    %v1187 = vand.u32 %v52, 4294901760
    %v1188 = vsub.f32 %v52, %v1187
    %v1189 = vand.u32 %v1188, 4294901760
    %1190 = vmatpush1.msra.mxu0 %v1189
    %1191 = vmatprep.subr.mxu0 0.0
    %v1192 = vand.u32 %v53, 4294901760
    %v1193 = vsub.f32 %v53, %v1192
    %v1194 = vand.u32 %v1193, 4294901760
    %1195 = vmatpush1.msra.mxu0 %v1194
    %1196 = vmatprep.subr.mxu0 0.0
    %v1197 = vand.u32 %v54, 4294901760
    %v1198 = vsub.f32 %v54, %v1197
    %v1199 = vand.u32 %v1198, 4294901760
    %1200 = vmatpush1.msra.mxu0 %v1199
    %1201 = vmatprep.subr.mxu0 0.0
    %v1202 = vand.u32 %v55, 4294901760
    %v1203 = vsub.f32 %v55, %v1202
    %v1204 = vand.u32 %v1203, 4294901760
    %1205 = vmatpush1.msra.mxu0 %v1204
    %1206 = vmatprep.subr.mxu0 0.0
    %v1207 = vand.u32 %v56, 4294901760
    %v1208 = vsub.f32 %v56, %v1207
    %v1209 = vand.u32 %v1208, 4294901760
    %1210 = vmatpush1.msra.mxu0 %v1209
    %1211 = vmatprep.subr.mxu0 0.0
    %v1212 = vand.u32 %v57, 4294901760
    %v1213 = vsub.f32 %v57, %v1212
    %v1214 = vand.u32 %v1213, 4294901760
    %1215 = vmatpush1.msra.mxu0 %v1214
    %1216 = vmatprep.subr.mxu0 0.0
    %1217 = vmatpush1.msra.mxu0 0.0
    %1218 = vmatprep.subr.mxu0 0.0
    %1219 = vmatpush1.msra.mxu0 0.0
    %1220 = vmatprep.subr.mxu0 0.0
    %1221 = vmatpush1.msra.mxu0 0.0
    %1222 = vmatprep.subr.mxu0 0.0
    %1223 = vmatpush1.msra.mxu0 0.0
    %1224 = vmatprep.subr.mxu0 0.0
    %1225 = vmatpush1.msra.mxu0 0.0
    %1226 = vmatprep.subr.mxu0 0.0
    %1227 = vmatpush1.msra.mxu0 0.0
    %1228 = vmatprep.subr.mxu0 0.0
    %1229 = vmatpush1.msra.mxu0 0.0
    %1230 = vmatprep.subr.mxu0 0.0
    %1231 = vmatpush1.msra.mxu0 0.0
    %1232 = vmatprep.subr.mxu0 0.0
    %1233 = vmatpush1.msra.mxu0 0.0
    %1234 = vmatprep.subr.mxu0 0.0
    %1235 = vmatpush1.msra.mxu0 0.0
    %1236 = vmatprep.subr.mxu0 0.0
    %1237 = vmatpush1.msra.mxu0 0.0
    %1238 = vmatprep.subr.mxu0 0.0
    %1239 = vmatpush1.msra.mxu0 0.0
    %1240 = vmatprep.subr.mxu0 0.0
    %1241 = vmatpush1.msra.mxu0 0.0
    %1242 = vmatprep.subr.mxu0 0.0
    %1243 = vmatpush1.msra.mxu0 0.0
    %1244 = vmatprep.subr.mxu0 0.0
    %1245 = vmatpush1.msra.mxu0 0.0
    %1246 = vmatprep.subr.mxu0 0.0
    %1247 = vmatpush1.msra.mxu0 0.0
    %1248 = vmatprep.mubr.f32.mxu0 0.0
    %v1249 = vand.u32 %v700, 4294901760
    %1250 = vmatmul.mubr.f32.gmra.mrb[0].mxu0 %v1249
    %v1251 = vpop.f32.mrb[0].mxu0
    %v1252 = vadd.f32 %v1133, %v1251
    %v1253 = vpop.f32.mrb[0].mxu0
    %1254 = vdwg.mxu0
    %1255 = vmatprep.subr.mxu0 0.0
    %v1256 = vand.u32 %v42, 4294901760
    %1257 = vmatpush1.msra.mxu0 %v1256
    %1258 = vmatprep.subr.mxu0 0.0
    %v1259 = vand.u32 %v43, 4294901760
    %1260 = vmatpush1.msra.mxu0 %v1259
    %1261 = vmatprep.subr.mxu0 0.0
    %v1262 = vand.u32 %v44, 4294901760
    %1263 = vmatpush1.msra.mxu0 %v1262
    %1264 = vmatprep.subr.mxu0 0.0
    %v1265 = vand.u32 %v45, 4294901760
    %1266 = vmatpush1.msra.mxu0 %v1265
    %1267 = vmatprep.subr.mxu0 0.0
    %v1268 = vand.u32 %v46, 4294901760
    %1269 = vmatpush1.msra.mxu0 %v1268
    %1270 = vmatprep.subr.mxu0 0.0
    %v1271 = vand.u32 %v47, 4294901760
    %1272 = vmatpush1.msra.mxu0 %v1271
    %1273 = vmatprep.subr.mxu0 0.0
    %v1274 = vand.u32 %v48, 4294901760
    %1275 = vmatpush1.msra.mxu0 %v1274
    %1276 = vmatprep.subr.mxu0 0.0
    %v1277 = vand.u32 %v49, 4294901760
    %1278 = vmatpush1.msra.mxu0 %v1277
    %1279 = vmatprep.subr.mxu0 0.0
    %v1280 = vand.u32 %v50, 4294901760
    %1281 = vmatpush1.msra.mxu0 %v1280
    %1282 = vmatprep.subr.mxu0 0.0
    %v1283 = vand.u32 %v51, 4294901760
    %1284 = vmatpush1.msra.mxu0 %v1283
    %1285 = vmatprep.subr.mxu0 0.0
    %v1286 = vand.u32 %v52, 4294901760
    %1287 = vmatpush1.msra.mxu0 %v1286
    %1288 = vmatprep.subr.mxu0 0.0
    %v1289 = vand.u32 %v53, 4294901760
    %1290 = vmatpush1.msra.mxu0 %v1289
    %1291 = vmatprep.subr.mxu0 0.0
    %v1292 = vand.u32 %v54, 4294901760
    %1293 = vmatpush1.msra.mxu0 %v1292
    %1294 = vmatprep.subr.mxu0 0.0
    %v1295 = vand.u32 %v55, 4294901760
    %1296 = vmatpush1.msra.mxu0 %v1295
    %1297 = vmatprep.subr.mxu0 0.0
    %v1298 = vand.u32 %v56, 4294901760
    %1299 = vmatpush1.msra.mxu0 %v1298
    %1300 = vmatprep.subr.mxu0 0.0
    %v1301 = vand.u32 %v57, 4294901760
    %1302 = vmatpush1.msra.mxu0 %v1301
    %1303 = vmatprep.subr.mxu0 0.0
    %1304 = vmatpush1.msra.mxu0 0.0
    %1305 = vmatprep.subr.mxu0 0.0
    %1306 = vmatpush1.msra.mxu0 0.0
    %1307 = vmatprep.subr.mxu0 0.0
    %1308 = vmatpush1.msra.mxu0 0.0
    %1309 = vmatprep.subr.mxu0 0.0
    %1310 = vmatpush1.msra.mxu0 0.0
    %1311 = vmatprep.subr.mxu0 0.0
    %1312 = vmatpush1.msra.mxu0 0.0
    %1313 = vmatprep.subr.mxu0 0.0
    %1314 = vmatpush1.msra.mxu0 0.0
    %1315 = vmatprep.subr.mxu0 0.0
    %1316 = vmatpush1.msra.mxu0 0.0
    %1317 = vmatprep.subr.mxu0 0.0
    %1318 = vmatpush1.msra.mxu0 0.0
    %1319 = vmatprep.subr.mxu0 0.0
    %1320 = vmatpush1.msra.mxu0 0.0
    %1321 = vmatprep.subr.mxu0 0.0
    %1322 = vmatpush1.msra.mxu0 0.0
    %1323 = vmatprep.subr.mxu0 0.0
    %1324 = vmatpush1.msra.mxu0 0.0
    %1325 = vmatprep.subr.mxu0 0.0
    %1326 = vmatpush1.msra.mxu0 0.0
    %1327 = vmatprep.subr.mxu0 0.0
    %1328 = vmatpush1.msra.mxu0 0.0
    %1329 = vmatprep.subr.mxu0 0.0
    %1330 = vmatpush1.msra.mxu0 0.0
    %1331 = vmatprep.subr.mxu0 0.0
    %1332 = vmatpush1.msra.mxu0 0.0
    %1333 = vmatprep.subr.mxu0 0.0
    %1334 = vmatpush1.msra.mxu0 0.0
    %1335 = vmatprep.mubr.f32.mxu0 0.0
    %v1336 = vand.u32 %v700, 4294901760
    %1337 = vmatmul.mubr.f32.gmra.mrb[0].mxu0 %v1336
    %v1338 = vpop.f32.mrb[0].mxu0
    %v1339 = vadd.f32 %v1252, %v1338
    %v1340 = vpop.f32.mrb[0].mxu0
    %1341 = vdwg.mxu0
    %v1342 = vrsqrt.pop %v1339
    %v1343 = vmul.f32 %v699, %v1342
    %v1344 = vld [vmem:[%s1] sm:$0x1]
    %v1346 = vlaneseq
    %v1347 = vshrl.u32 %v1346, 7
    %v1348 = vsub.s32 0, %v1347
    %v1349 = vrot.slane %v1344, %v1348
    %v1351 = vmul.f32 %v1343, %v1349
    %1352 = vst [vmem:[#allocation7] sm:$0xff] %v1351
    // Predicated region
    $region22: #{tpu_custom_call.1} parent=1 // pred_check
      _
    $region23: #{tpu_custom_call.1} parent=1 // pred_check_branch
      %1354 = sbr.rel (0) target = $region25
    $region24: #{tpu_custom_call.1} parent=1 // pred_region
      %s1356 = ssub.s32 128, 128
      %1357 = vsyncadd [#allocation4], %s1356
      %s1359 = sshll.u32 [#allocation7], 4
      %s1360 = int_to_ptr.vmem [resolvable:$true] %s1359
      %1362 = dma.vmem_to_hbm [thread:$0]  %s1360, 128, %s3, [#allocation4]
    $region25: #{tpu_custom_call.1} parent=1 // pred_fallthru
      _
    // Predicated region
    $region26: #{tpu_custom_call.1} parent=1 // pred_check
      _
    $region27: #{tpu_custom_call.1} parent=1 // pred_check_branch
      %1364 = sbr.rel (0) target = $region29
    $region28: #{tpu_custom_call.1} parent=1 // pred_region
      %1365 = dma.done [#allocation4], 128
    $region29: #{tpu_custom_call.1} parent=1 // pred_fallthru
      _
    %1366 = vsyncpa [#allocation3], 1
    %1367 = vsyncpa [#allocation6], 1
    %1368 = vsyncpa [#allocation4], 1

</llo_original>
